<compile_context>
chip_gen: v6e
topology: v6e:2x2x1
jax: 0.10.0
libtpu: 0.0.40
codegen_flags: <defaults>
</compile_context>

<pallas_src>
import math

import jax
import jax.numpy as jnp
import numpy as np
from jax.experimental import pallas as pl
from jax.experimental.pallas import tpu as pltpu


def _round_up(x, m):
    return ((x + m - 1) // m) * m


# ----------------------------------------------------------------------------
# Deterministic buffer construction (mirrors FromSOFT.__init__ shapes).
# ----------------------------------------------------------------------------
def soft_grid(res):
    i = jnp.arange(res, dtype=jnp.float32)
    betas = (i + 0.5) / res * math.pi
    alphas = i / res * 2.0 * math.pi
    return betas, alphas


def make_buffers(res, lmax):
    """Build sha [M, A] and shb [M, B, I] deterministically.

    M = 2*lmax+1, A = B = res, I = (lmax+1)**2.
    sha is the exact alpha-part of real spherical harmonics (cos/sin table).
    shb stands in for the precontracted beta-part table.
    """
    betas, alphas = soft_grid(res)
    M = 2 * lmax + 1
    I = (lmax + 1) ** 2

    # sha[m_idx, a] with m = m_idx - lmax: sqrt(2)*cos(m a) (m>0), 1 (m=0),
    # sqrt(2)*sin(|m| a) (m<0)  -- the standard real-SH alpha factor.
    ms = jnp.arange(-lmax, lmax + 1, dtype=jnp.float32)[:, None]       # [M, 1]
    a = alphas[None, :]                                                # [1, A]
    sha = jnp.where(
        ms > 0, math.sqrt(2.0) * jnp.cos(ms * a),
        jnp.where(ms < 0, math.sqrt(2.0) * jnp.sin(-ms * a),
                  jnp.ones_like(ms * a)))                              # [M, A]

    # TODO(synk): shb requires associated Legendre tables, the e3nn expand
    # matrix and S3 quadrature weights (o3/S3 not available here); replaced by
    # a deterministic synthetic buffer with the correct [M, B, I] shape.
    key = jax.random.PRNGKey(42)
    shb = jax.random.normal(key, (M, res, I), dtype=jnp.float32) / math.sqrt(res)
    return sha.astype(jnp.float32), shb.astype(jnp.float32)


# ----------------------------------------------------------------------------
# One-time "init" glue: fold sha and shb into a single fused weight
#   W[b*A + a, i] = sum_m sha[m, a] * shb[m, b, i]
# cast to bf16.  Done once per module, NOT per forward call.
# ----------------------------------------------------------------------------
def make_fused_weight(sha, shb, *, dtype=jnp.bfloat16):
    M, A = sha.shape
    M2, B, I = shb.shape
    assert M == M2
    w = jnp.einsum('ma,mbi->bai', sha.astype(jnp.float32),
                   shb.astype(jnp.float32)).reshape(B * A, I)      # [B*A, I]
    return w.astype(dtype)


# ----------------------------------------------------------------------------
# Pallas kernel: single fused matmul  out[z, i] = bf16(x[z, k]) @ W[k, i]
# ----------------------------------------------------------------------------
def from_soft_kernel(x_ref, w_ref, o_ref):
    # x_ref: [TZ, K] f32  -> cast to bf16 in-kernel (VPU; avoids a separate
    # wrapper cast pass over x in HBM).
    # w_ref: [K, I] bf16   o_ref: [TZ, I] bf16 (f32 MXU accumulation).
    x = x_ref[...].astype(jnp.bfloat16)
    acc = jnp.dot(x, w_ref[...], preferred_element_type=jnp.float32)
    o_ref[...] = acc.astype(o_ref.dtype)


def _choose_tz(Z, K, I, w_bytes):
    """Pick a z-tile: as large as a conservative VMEM budget allows, but with
    >= 2 grid steps for large Z so the "parallel" grid axis can be split
    across both v7x TensorCores."""
    if Z <= 512:
        # Single full-extent block (block dim == full array dim is always
        # BlockSpec-legal, including Z < 8).  Small problems are per-step
        # overhead-bound; one step is optimal.
        return Z
    # VMEM budget: stay well under the 32 MiB scoped default (v7x-safe:
    # 64 MiB physical).  Double-buffered f32 x tile + double-buffered bf16
    # out tile + double-buffered (small) weight.
    budget = 24 * (1 << 20) - 2 * int(w_bytes)
    row_bytes = 2 * (K * 4) + 2 * (I * 2)
    cap = budget // row_bytes
    cap = max(256, min(int(cap), 4096))
    cap -= cap % 256                      # MXU/vreg-friendly row multiple
    # Keep at least two grid steps (megacore on v7x).
    half = _round_up(-(-Z // 2), 256)
    return max(256, min(cap, half))


def from_soft(x, w, *, tz=None, out_dtype=jnp.bfloat16):
    """x: [..., beta, alpha] -> [..., I] using the fused weight W [B*A, I]."""
    size = x.shape[:-2]
    B, A = x.shape[-2], x.shape[-1]
    K, I = w.shape
    assert K == B * A, (K, B, A)

    # Contiguous reshape only (free in XLA): the kernel sees a lane-dense
    # [Z, K] f32 operand -- no wrapper-side cast, pad or slice passes.
    xf = x.reshape(-1, K)
    Z = xf.shape[0]

    if tz is None:
        tz = _choose_tz(Z, K, I, w.size * w.dtype.itemsize)
    grid = (pl.cdiv(Z, tz),)

    # Advisory cost so XLA can overlap surrounding ops with the custom call.
    cost = pl.CostEstimate(
        flops=2 * Z * K * I,
        transcendentals=0,
        bytes_accessed=Z * K * xf.dtype.itemsize
                       + K * I * w.dtype.itemsize
                       + Z * I * jnp.dtype(out_dtype).itemsize)

    out = pl.pallas_call(
        from_soft_kernel,
        out_shape=jax.ShapeDtypeStruct((Z, I), out_dtype),
        grid_spec=pltpu.PrefetchScalarGridSpec(
            num_scalar_prefetch=0,
            grid=grid,
            in_specs=[
                pl.BlockSpec((tz, K), lambda z: (z, 0)),
                # Constant weight: same block every step (Pallas reuses the
                # resident copy; the table is ~32 KiB at res=16).  For large
                # res, single-buffer it via pipeline_mode=pl.Buffered(1) to
                # reclaim VMEM for a bigger z tile.
                pl.BlockSpec((K, I), lambda z: (0, 0)),
            ],
            out_specs=pl.BlockSpec((tz, I), lambda z: (z, 0)),
        ),
        compiler_params=pltpu.CompilerParams(
            dimension_semantics=("parallel",)),
        cost_estimate=cost,
    )(xf, w)

    return out.reshape(*size, I)


# ----------------------------------------------------------------------------
# Reference (plain JAX f32, mirrors the torch.einsum forward exactly).
# ----------------------------------------------------------------------------
def from_soft_ref(x, sha, shb):
    size = x.shape[:-2]
    B, A = x.shape[-2], x.shape[-1]
    xf = x.reshape(-1, B, A).astype(jnp.float32)
    inner = jnp.einsum('ma,zba->zbm', sha, xf)
    out = jnp.einsum('mbi,zbm->zi', shb, inner)
    return out.reshape(*size, out.shape[-1])


if __name__ == "__main__":
    res = 16
    lmax = res // 2 - 1          # 7  -> M = 15, I = 64
    sha, shb = make_buffers(res, lmax)

    # "Module init": fuse sha/shb once, outside the per-call path.
    w = make_fused_weight(sha, shb)

    key = jax.random.PRNGKey(0)
    x = jax.random.normal(key, (2, 4, res, res), dtype=jnp.float32)

    out = from_soft(x, w)
    out = jax.block_until_ready(out)

    ref = from_soft_ref(x, sha, shb)
    assert out.shape == (2, 4, (lmax + 1) ** 2), out.shape
    # bf16 x/W with f32 accumulation and bf16 output: rel error ~1e-3..1e-2.
    np.testing.assert_allclose(np.asarray(out, dtype=np.float32),
                               np.asarray(ref), rtol=3e-2, atol=3e-1)
    print("KERNEL_OK")
</pallas_src>

<mosaic_0001>
module attributes {stable_mosaic.version = 11 : i64} {
  func.func @from_soft_kernel(%arg0: i32, %arg1: memref<8x256xf32, #tpu.memory_space<vmem>>, %arg2: memref<256x64xbf16, #tpu.memory_space<vmem>>, %arg3: memref<8x64xbf16, #tpu.memory_space<vmem>>) attributes {dimension_semantics = [#tpu.dimension_semantics<parallel>], iteration_bounds = array<i64: 1>, scalar_prefetch = 0 : i64, scratch_operands = 0 : i64, tpu.core_type = #tpu.core_type<tc>, window_params = [{transform_indices = @transform_0, window_bounds = array<i64: 8, 256>}, {pipeline_mode = #tpu.pipeline_mode<synchronous>, transform_indices = @transform_1, window_bounds = array<i64: 256, 64>}, {transform_indices = @transform_2, window_bounds = array<i64: 8, 64>}]} {
    %c0 = arith.constant 0 : index
    %c0_0 = arith.constant 0 : index
    %0 = vector.load %arg1[%c0, %c0_0] : memref<8x256xf32, #tpu.memory_space<vmem>>, vector<8x256xf32>
    %1 = arith.truncf %0 : vector<8x256xf32> to vector<8x256xbf16>
    %c0_1 = arith.constant 0 : index
    %c0_2 = arith.constant 0 : index
    %2 = vector.load %arg2[%c0_1, %c0_2] : memref<256x64xbf16, #tpu.memory_space<vmem>>, vector<256x64xbf16>
    %cst = arith.constant dense<0.000000e+00> : vector<8x64xf32>
    %3 = tpu.matmul %1, %2, %cst {dimension_numbers = #tpu.dot_dimension_numbers<[1], [0], [0], [1], [0, 0, 1, 1], [], []>} : vector<8x256xbf16>, vector<256x64xbf16>, vector<8x64xf32> -> vector<8x64xf32>
    %4 = arith.truncf %3 : vector<8x64xf32> to vector<8x64xbf16>
    %c0_3 = arith.constant 0 : index
    %c0_4 = arith.constant 0 : index
    %5 = vector.load %arg3[%c0_3, %c0_4] : memref<8x64xbf16, #tpu.memory_space<vmem>>, vector<8x64xbf16>
    tpu.vector_store %arg3[%c0_3, %c0_4], %4 {strides = array<i32>} : memref<8x64xbf16, #tpu.memory_space<vmem>>, vector<8x64xbf16>,
    return
  }
  func.func @transform_0(%arg0: i32) -> (i32, i32) {
    %c0_i32 = arith.constant 0 : i32
    %c0_i32_0 = arith.constant 0 : i32
    return %arg0, %c0_i32 : i32, i32
  }
  func.func @transform_1(%arg0: i32) -> (i32, i32) {
    %c0_i32 = arith.constant 0 : i32
    %c0_i32_0 = arith.constant 0 : i32
    %c0_i32_1 = arith.constant 0 : i32
    return %c0_i32, %c0_i32_0 : i32, i32
  }
  func.func @transform_2(%arg0: i32) -> (i32, i32) {
    %c0_i32 = arith.constant 0 : i32
    %c0_i32_0 = arith.constant 0 : i32
    return %arg0, %c0_i32 : i32, i32
  }
}

</mosaic_0001>

<llo_original>
// kernel: tpu_custom_call.1
$region0: #{tpu_custom_call.1}
  #allocation0 [shape = 'u32[]', space=smem, size = 0x4, offset = 0x4, fixed_abs, tag = 'smem constant byte address 0x4 - core index']
  #allocation1 [shape = 'u32[144,128]{1,0:T(1,128)}', space=vmem, size = 0x12000, scoped, tag = 'internal scratch']
  %s0 = inlined_call_operand.vmem [shape: f32[8,256], index: 0, kind: input, shape index: {}]
  %s1 = inlined_call_operand.vmem [shape: bf16[256,64], index: 1, kind: input, shape index: {}]
  %s2 = inlined_call_operand.hbm [shape: bf16[8,64], index: 2, kind: output, shape index: {}]
  %s3 = sld [smem:[#allocation0]]
  $region18: #{tpu_custom_call.1} parent=0
    _
  %s5 = ssub.s32 1, %s3
  %s6 = scalar_select 0, %s5, %s3
  $region1: #{tpu_custom_call.1} parent=0
    #allocation2 [shape = 'u8[2048]{0}', space=vmem, size = 0x800, scoped, tag = 'output window, operand 0, single buffered']
    #allocation3 [shape = 's32[1]{0}', space=sflag, size = 0x4, scoped, tag = 'scoped memory for tpu_custom_call.1']
    %7 = vsyncpa [#allocation3], 0
    // Predicated region
    $region2: #{tpu_custom_call.1} parent=1 // pred_check
      _
    $region3: #{tpu_custom_call.1} parent=1 // pred_check_branch
      %9 = sbr.rel (0) target = $region5
    $region4: #{tpu_custom_call.1} parent=1 // pred_region
      _
    $region5: #{tpu_custom_call.1} parent=1 // pred_fallthru
      _
    // Predicated region
    $region6: #{tpu_custom_call.1} parent=1 // pred_check
      _
    $region7: #{tpu_custom_call.1} parent=1 // pred_check_branch
      %11 = sbr.rel (0) target = $region9
    $region8: #{tpu_custom_call.1} parent=1 // pred_region
      _
    $region9: #{tpu_custom_call.1} parent=1 // pred_fallthru
      _
    %v13 = vld [vmem:[%s0] sm:$0xff]
    %v14 = vld [vmem:[%s0 + $0x8] sm:$0xff]
    %v15 = vpack.c.bf16 %v13, %v13
    %v16 = vpack.c.bf16 %v14, %v14
    %v17 = vld [vmem:[%s1] sm:$0xf]
    %v18 = vld [vmem:[%s1 + $0x4] sm:$0xf]
    %v19 = vld [vmem:[%s1 + $0x8] sm:$0xf]
    %v20 = vld [vmem:[%s1 + $0xc] sm:$0xf]
    %v21 = vld [vmem:[%s1 + $0x10] sm:$0xf]
    %v22 = vld [vmem:[%s1 + $0x14] sm:$0xf]
    %v23 = vld [vmem:[%s1 + $0x18] sm:$0xf]
    %v24 = vld [vmem:[%s1 + $0x1c] sm:$0xf]
    %v25 = vld [vmem:[%s1 + $0x20] sm:$0xf]
    %v26 = vld [vmem:[%s1 + $0x24] sm:$0xf]
    %v27 = vld [vmem:[%s1 + $0x28] sm:$0xf]
    %v28 = vld [vmem:[%s1 + $0x2c] sm:$0xf]
    %v29 = vld [vmem:[%s1 + $0x30] sm:$0xf]
    %v30 = vld [vmem:[%s1 + $0x34] sm:$0xf]
    %v31 = vld [vmem:[%s1 + $0x38] sm:$0xf]
    %v32 = vld [vmem:[%s1 + $0x3c] sm:$0xf]
    %v33 = vld [vmem:[%s1 + $0x40] sm:$0xf]
    %v34 = vld [vmem:[%s1 + $0x44] sm:$0xf]
    %v35 = vld [vmem:[%s1 + $0x48] sm:$0xf]
    %v36 = vld [vmem:[%s1 + $0x4c] sm:$0xf]
    %v37 = vld [vmem:[%s1 + $0x50] sm:$0xf]
    %v38 = vld [vmem:[%s1 + $0x54] sm:$0xf]
    %v39 = vld [vmem:[%s1 + $0x58] sm:$0xf]
    %v40 = vld [vmem:[%s1 + $0x5c] sm:$0xf]
    %v41 = vld [vmem:[%s1 + $0x60] sm:$0xf]
    %v42 = vld [vmem:[%s1 + $0x64] sm:$0xf]
    %v43 = vld [vmem:[%s1 + $0x68] sm:$0xf]
    %v44 = vld [vmem:[%s1 + $0x6c] sm:$0xf]
    %v45 = vld [vmem:[%s1 + $0x70] sm:$0xf]
    %v46 = vld [vmem:[%s1 + $0x74] sm:$0xf]
    %v47 = vld [vmem:[%s1 + $0x78] sm:$0xf]
    %v48 = vld [vmem:[%s1 + $0x7c] sm:$0xf]
    %v81 = vunpack.c.l.b16 %v17
    %v82 = vunpack.c.l.b16 %v18
    %v83 = vunpack.c.l.b16 %v19
    %v84 = vunpack.c.l.b16 %v20
    %v85 = vunpack.c.l.b16 %v21
    %v86 = vunpack.c.l.b16 %v22
    %v87 = vunpack.c.l.b16 %v23
    %v88 = vunpack.c.l.b16 %v24
    %v89 = vunpack.c.l.b16 %v25
    %v90 = vunpack.c.l.b16 %v26
    %v91 = vunpack.c.l.b16 %v27
    %v92 = vunpack.c.l.b16 %v28
    %v93 = vunpack.c.l.b16 %v29
    %v94 = vunpack.c.l.b16 %v30
    %v95 = vunpack.c.l.b16 %v31
    %v96 = vunpack.c.l.b16 %v32
    %v97 = vunpack.c.l.b16 %v33
    %v98 = vunpack.c.l.b16 %v34
    %v99 = vunpack.c.l.b16 %v35
    %v100 = vunpack.c.l.b16 %v36
    %v101 = vunpack.c.l.b16 %v37
    %v102 = vunpack.c.l.b16 %v38
    %v103 = vunpack.c.l.b16 %v39
    %v104 = vunpack.c.l.b16 %v40
    %v105 = vunpack.c.l.b16 %v41
    %v106 = vunpack.c.l.b16 %v42
    %v107 = vunpack.c.l.b16 %v43
    %v108 = vunpack.c.l.b16 %v44
    %v109 = vunpack.c.l.b16 %v45
    %v110 = vunpack.c.l.b16 %v46
    %v111 = vunpack.c.l.b16 %v47
    %v112 = vunpack.c.l.b16 %v48
    %v113 = vpack.c.b16 %v82, %v81
    %v114 = vpack.c.b16 %v84, %v83
    %v115 = vpack.c.b16 %v86, %v85
    %v116 = vpack.c.b16 %v88, %v87
    %v117 = vpack.c.b16 %v90, %v89
    %v118 = vpack.c.b16 %v92, %v91
    %v119 = vpack.c.b16 %v94, %v93
    %v120 = vpack.c.b16 %v96, %v95
    %v121 = vpack.c.b16 %v98, %v97
    %v122 = vpack.c.b16 %v100, %v99
    %v123 = vpack.c.b16 %v102, %v101
    %v124 = vpack.c.b16 %v104, %v103
    %v125 = vpack.c.b16 %v106, %v105
    %v126 = vpack.c.b16 %v108, %v107
    %v127 = vpack.c.b16 %v110, %v109
    %v128 = vpack.c.b16 %v112, %v111
    %145 = vmatprep.subr.bf16.mxu0 0
    %146 = vmatpush1.bf16.msra.mxu0 %v120
    %147 = vmatprep.subr.bf16.mxu0 0
    %148 = vmatpush1.bf16.msra.mxu0 %v119
    %149 = vmatprep.subr.bf16.mxu0 0
    %150 = vmatpush1.bf16.msra.mxu0 %v118
    %151 = vmatprep.subr.bf16.mxu0 0
    %152 = vmatpush1.bf16.msra.mxu0 %v117
    %153 = vmatprep.subr.bf16.mxu0 0
    %154 = vmatpush1.bf16.msra.mxu0 %v116
    %155 = vmatprep.subr.bf16.mxu0 0
    %156 = vmatpush1.bf16.msra.mxu0 %v115
    %157 = vmatprep.subr.bf16.mxu0 0
    %158 = vmatpush1.bf16.msra.mxu0 %v114
    %159 = vmatprep.subr.bf16.mxu0 0
    %160 = vmatpush1.bf16.msra.mxu0 %v113
    %161 = vmatprep.subr.bf16.mxu0 0
    %162 = vmatpush2.bf16.msra.mxu0 %v128
    %163 = vmatprep.subr.bf16.mxu0 0
    %164 = vmatpush2.bf16.msra.mxu0 %v127
    %165 = vmatprep.subr.bf16.mxu0 0
    %166 = vmatpush2.bf16.msra.mxu0 %v126
    %167 = vmatprep.subr.bf16.mxu0 0
    %168 = vmatpush2.bf16.msra.mxu0 %v125
    %169 = vmatprep.subr.bf16.mxu0 0
    %170 = vmatpush2.bf16.msra.mxu0 %v124
    %171 = vmatprep.subr.bf16.mxu0 0
    %172 = vmatpush2.bf16.msra.mxu0 %v123
    %173 = vmatprep.subr.bf16.mxu0 0
    %174 = vmatpush2.bf16.msra.mxu0 %v122
    %175 = vmatprep.subr.bf16.mxu0 0
    %176 = vmatpush2.bf16.msra.mxu0 %v121
    %177 = vmatprep.mubr.bf16.mxu0 %v16
    %178 = vmatmul.mubr.bf16.gmra.mxu0 %v15
    %v179 = vpop.f32.mrf.mxu0
    %v180 = vadd.f32 0.0, %v179
    %v181 = vpop.f32.mrf.mxu0
    %v182 = vpop.f32.mrf.mxu0
    %v183 = vpop.f32.mrf.mxu0
    %184 = vdwg.mxu0
    %v185 = vpack.c.bf16 %v180, %v180
    %vm186 = vcmask 519168
    %187 = vst.msk [vmem:[#allocation2] sm:$0xf] %vm186, %v185
    // Predicated region
    $region10: #{tpu_custom_call.1} parent=1 // pred_check
      _
    $region11: #{tpu_custom_call.1} parent=1 // pred_check_branch
      %189 = sbr.rel (0) target = $region13
    $region12: #{tpu_custom_call.1} parent=1 // pred_region
      %s191 = ssub.s32 64, 64
      %192 = vsyncadd [#allocation3], %s191
      %s194 = sshll.u32 [#allocation2], 4
      %s195 = int_to_ptr.vmem [resolvable:$true] %s194
      %197 = dma.vmem_to_hbm [thread:$0]  %s195, 64, %s2, [#allocation3]
    $region13: #{tpu_custom_call.1} parent=1 // pred_fallthru
      _
    // Predicated region
    $region14: #{tpu_custom_call.1} parent=1 // pred_check
      _
    $region15: #{tpu_custom_call.1} parent=1 // pred_check_branch
      %199 = sbr.rel (0) target = $region17
    $region16: #{tpu_custom_call.1} parent=1 // pred_region
      %200 = dma.done [#allocation3], 64
    $region17: #{tpu_custom_call.1} parent=1 // pred_fallthru
      _
    %201 = vsyncpa [#allocation3], 1

</llo_original>
